<compile_context>
chip_gen: v7x
topology: tpu7x:2x2x1
jax: 0.10.0
libtpu: 0.0.40
codegen_flags: <defaults>
</compile_context>

<pallas_src>
import functools

import jax
import jax.numpy as jnp
from jax.experimental import pallas as pl
from jax.experimental.pallas import tpu as pltpu


def _round_up(x, m):
    return ((x + m - 1) // m) * m


def _mlp_kernel(x_ref, w1_ref, b1_ref, w2_ref, b2_ref, w3_ref, b3_ref, o_ref):
    # In-kernel cast to bf16 (hidden under the DMA / MXU work).
    x = x_ref[...].astype(jnp.bfloat16)

    # fc1 (+ folded BN1) + ReLU.  bf16 matmul, f32 accumulate, f32 epilogue.
    h1 = jnp.dot(x, w1_ref[...], preferred_element_type=jnp.float32)
    h1 = jnp.maximum(h1 + b1_ref[...], 0.0).astype(jnp.bfloat16)

    # fc2 (+ folded BN2) + ReLU.
    h2 = jnp.dot(h1, w2_ref[...], preferred_element_type=jnp.float32)
    h2 = jnp.maximum(h2 + b2_ref[...], 0.0)  # keep f32 for the tiny fc3 matmul

    # fc3: f32 matmul, unpadded N output (masked stores, but far fewer bytes).
    o_ref[...] = (
        jnp.dot(h2, w3_ref[...], preferred_element_type=jnp.float32) + b3_ref[...]
    )


@functools.partial(jax.jit, static_argnames=("tile_b",))
def mlp_forward(x, params, *, tile_b=2048):
    """x: [B, in_features] float32.  Returns [B, out_features] float32."""
    eps = 1e-5
    f32 = jnp.float32
    bf16 = jnp.bfloat16

    # --- Fold BatchNorm1d (eval mode) exactly into fc1 / fc2 weights & bias. ---
    s1 = params["bn1_gamma"] / jnp.sqrt(params["bn1_var"] + eps)
    t1 = params["bn1_beta"] - params["bn1_mean"] * s1
    s2 = params["bn2_gamma"] / jnp.sqrt(params["bn2_var"] + eps)
    t2 = params["bn2_beta"] - params["bn2_mean"] * s2

    # Pre-transpose Linear weights to [in, out] so the kernel computes x @ W.
    w1 = (params["fc1_w"].T * s1[None, :]).astype(bf16)
    b1 = (params["fc1_b"] * s1 + t1).reshape(1, -1).astype(f32)
    w2 = (params["fc2_w"].T * s2[None, :]).astype(bf16)
    b2 = (params["fc2_b"] * s2 + t2).reshape(1, -1).astype(f32)
    w3 = params["fc3_w"].T.astype(f32)               # fc3 kept in f32
    b3 = params["fc3_b"].reshape(1, -1).astype(f32)

    B, K = x.shape
    H1 = w1.shape[1]          # 256
    H2 = w2.shape[1]          # 128
    N = w3.shape[1]           # out_features (unpadded)

    # --- Batch tiling: small padding waste; >=2 grid steps for v7x megacore. ---
    n_steps = max(1, pl.cdiv(B, tile_b))
    if n_steps == 1 and B >= 16:
        n_steps = 2
    tb = _round_up(pl.cdiv(B, n_steps), 8)
    B_pad = _round_up(B, tb)
    grid = (B_pad // tb,)

    x_in = x.astype(f32)
    if B_pad != B:
        x_in = jnp.pad(x_in, ((0, B_pad - B), (0, 0)))

    # x / out tiles stream over the batch; weights & biases stay resident.
    in_specs = [
        pl.BlockSpec((tb, K), lambda i: (i, 0)),      # x tile (f32, unpadded K)
        pl.BlockSpec((K, H1), lambda i: (0, 0)),      # w1 (resident, bf16)
        pl.BlockSpec((1, H1), lambda i: (0, 0)),      # b1
        pl.BlockSpec((H1, H2), lambda i: (0, 0)),     # w2 (bf16)
        pl.BlockSpec((1, H2), lambda i: (0, 0)),      # b2
        pl.BlockSpec((H2, N), lambda i: (0, 0)),      # w3 (f32, unpadded N)
        pl.BlockSpec((1, N), lambda i: (0, 0)),       # b3
    ]
    out_specs = pl.BlockSpec((tb, N), lambda i: (i, 0))

    flops = 2 * B_pad * (K * H1 + H1 * H2 + H2 * N)
    bytes_accessed = (
        B_pad * K * 4                       # x read (f32)
        + w1.size * 2 + w2.size * 2         # bf16 weights
        + w3.size * 4                       # f32 fc3 weight
        + (b1.size + b2.size + b3.size) * 4
        + B_pad * N * 4                     # unpadded f32 output
    )

    out = pl.pallas_call(
        _mlp_kernel,
        out_shape=jax.ShapeDtypeStruct((B_pad, N), f32),
        grid=grid,
        in_specs=in_specs,
        out_specs=out_specs,
        compiler_params=pltpu.CompilerParams(
            dimension_semantics=("parallel",),
            vmem_limit_bytes=32 * 1024 * 1024,
        ),
        cost_estimate=pl.CostEstimate(
            flops=flops, transcendentals=0, bytes_accessed=bytes_accessed
        ),
    )(x_in, w1, b1, w2, b2, w3, b3)

    return out if B_pad == B else out[:B]


def init_params(key, in_features, out_features):
    ks = jax.random.split(key, 6)

    def linear_init(kw, kb, fan_in, fan_out):
        bound = 1.0 / jnp.sqrt(fan_in)
        w = jax.random.uniform(kw, (fan_out, fan_in), jnp.float32, -bound, bound)
        b = jax.random.uniform(kb, (fan_out,), jnp.float32, -bound, bound)
        return w, b

    fc1_w, fc1_b = linear_init(ks[0], ks[1], in_features, 256)
    fc2_w, fc2_b = linear_init(ks[2], ks[3], 256, 128)
    fc3_w, fc3_b = linear_init(ks[4], ks[5], 128, out_features)

    return {
        "fc1_w": fc1_w, "fc1_b": fc1_b,
        "fc2_w": fc2_w, "fc2_b": fc2_b,
        "fc3_w": fc3_w, "fc3_b": fc3_b,
        # BatchNorm1d default affine / running stats (eval mode).
        "bn1_gamma": jnp.ones((256,), jnp.float32),
        "bn1_beta": jnp.zeros((256,), jnp.float32),
        "bn1_mean": jnp.zeros((256,), jnp.float32),
        "bn1_var": jnp.ones((256,), jnp.float32),
        "bn2_gamma": jnp.ones((128,), jnp.float32),
        "bn2_beta": jnp.zeros((128,), jnp.float32),
        "bn2_mean": jnp.zeros((128,), jnp.float32),
        "bn2_var": jnp.ones((128,), jnp.float32),
    }


if __name__ == "__main__":
    key = jax.random.PRNGKey(0)
    k_x, k_p = jax.random.split(key)

    batch, in_features, out_features = 8, 32, 10
    x = jax.random.normal(k_x, (batch, in_features), jnp.float32)
    params = init_params(k_p, in_features, out_features)

    out = mlp_forward(x, params)
    jax.block_until_ready(out)
    assert out.shape == (batch, out_features)

    # Reference check in plain JAX (eval-mode semantics, f32).
    eps = 1e-5
    h = x @ params["fc1_w"].T + params["fc1_b"]
    h = jnp.maximum((h - params["bn1_mean"]) / jnp.sqrt(params["bn1_var"] + eps)
                    * params["bn1_gamma"] + params["bn1_beta"], 0.0)
    h = h @ params["fc2_w"].T + params["fc2_b"]
    h = jnp.maximum((h - params["bn2_mean"]) / jnp.sqrt(params["bn2_var"] + eps)
                    * params["bn2_gamma"] + params["bn2_beta"], 0.0)
    ref = h @ params["fc3_w"].T + params["fc3_b"]

    # fc1/fc2 run in bf16 with f32 accumulation -> loosened tolerance.
    assert jnp.allclose(out, ref, atol=5e-2, rtol=5e-2), "mismatch vs JAX reference"

    print("KERNEL_OK")
</pallas_src>

<mosaic_0001>
module attributes {stable_mosaic.version = 11 : i64} {
  func.func @_mlp_kernel(%arg0: i32, %arg1: memref<8x32xf32, #tpu.memory_space<vmem>>, %arg2: memref<32x256xbf16, #tpu.memory_space<vmem>>, %arg3: memref<1x256xf32, #tpu.memory_space<vmem>>, %arg4: memref<256x128xbf16, #tpu.memory_space<vmem>>, %arg5: memref<1x128xf32, #tpu.memory_space<vmem>>, %arg6: memref<128x10xf32, #tpu.memory_space<vmem>>, %arg7: memref<1x10xf32, #tpu.memory_space<vmem>>, %arg8: memref<8x10xf32, #tpu.memory_space<vmem>>) attributes {dimension_semantics = [#tpu.dimension_semantics<parallel>], iteration_bounds = array<i64: 1>, scalar_prefetch = 0 : i64, scratch_operands = 0 : i64, tpu.core_type = #tpu.core_type<tc>, window_params = [{transform_indices = @transform_0, window_bounds = array<i64: 8, 32>}, {pipeline_mode = #tpu.pipeline_mode<synchronous>, transform_indices = @transform_1, window_bounds = array<i64: 32, 256>}, {pipeline_mode = #tpu.pipeline_mode<synchronous>, transform_indices = @transform_2, window_bounds = array<i64: 1, 256>}, {pipeline_mode = #tpu.pipeline_mode<synchronous>, transform_indices = @transform_3, window_bounds = array<i64: 256, 128>}, {pipeline_mode = #tpu.pipeline_mode<synchronous>, transform_indices = @transform_4, window_bounds = array<i64: 1, 128>}, {pipeline_mode = #tpu.pipeline_mode<synchronous>, transform_indices = @transform_5, window_bounds = array<i64: 128, 10>}, {pipeline_mode = #tpu.pipeline_mode<synchronous>, transform_indices = @transform_6, window_bounds = array<i64: 1, 10>}, {transform_indices = @transform_7, window_bounds = array<i64: 8, 10>}]} {
    %c0 = arith.constant 0 : index
    %c0_0 = arith.constant 0 : index
    %0 = vector.load %arg1[%c0, %c0_0] : memref<8x32xf32, #tpu.memory_space<vmem>>, vector<8x32xf32>
    %1 = arith.truncf %0 : vector<8x32xf32> to vector<8x32xbf16>
    %c0_1 = arith.constant 0 : index
    %c0_2 = arith.constant 0 : index
    %2 = vector.load %arg2[%c0_1, %c0_2] : memref<32x256xbf16, #tpu.memory_space<vmem>>, vector<32x256xbf16>
    %cst = arith.constant dense<0.000000e+00> : vector<8x256xf32>
    %3 = tpu.matmul %1, %2, %cst {dimension_numbers = #tpu.dot_dimension_numbers<[1], [0], [0], [1], [0, 0, 1, 1], [], []>} : vector<8x32xbf16>, vector<32x256xbf16>, vector<8x256xf32> -> vector<8x256xf32>
    %c0_3 = arith.constant 0 : index
    %c0_4 = arith.constant 0 : index
    %4 = vector.load %arg3[%c0_3, %c0_4] : memref<1x256xf32, #tpu.memory_space<vmem>>, vector<1x256xf32>
    %5 = vector.broadcast %4 : vector<1x256xf32> to vector<8x256xf32>
    %6 = arith.addf %3, %5 : vector<8x256xf32>
    %cst_5 = arith.constant 0.000000e+00 : f32
    %7 = vector.broadcast %cst_5 : f32 to vector<8x256xf32>
    %8 = arith.maximumf %6, %7 : vector<8x256xf32>
    %9 = arith.truncf %8 : vector<8x256xf32> to vector<8x256xbf16>
    %c0_6 = arith.constant 0 : index
    %c0_7 = arith.constant 0 : index
    %10 = vector.load %arg4[%c0_6, %c0_7] : memref<256x128xbf16, #tpu.memory_space<vmem>>, vector<256x128xbf16>
    %cst_8 = arith.constant dense<0.000000e+00> : vector<8x128xf32>
    %11 = tpu.matmul %9, %10, %cst_8 {dimension_numbers = #tpu.dot_dimension_numbers<[1], [0], [0], [1], [0, 0, 1, 1], [], []>} : vector<8x256xbf16>, vector<256x128xbf16>, vector<8x128xf32> -> vector<8x128xf32>
    %c0_9 = arith.constant 0 : index
    %c0_10 = arith.constant 0 : index
    %12 = vector.load %arg5[%c0_9, %c0_10] : memref<1x128xf32, #tpu.memory_space<vmem>>, vector<1x128xf32>
    %13 = vector.broadcast %12 : vector<1x128xf32> to vector<8x128xf32>
    %14 = arith.addf %11, %13 : vector<8x128xf32>
    %cst_11 = arith.constant 0.000000e+00 : f32
    %15 = vector.broadcast %cst_11 : f32 to vector<8x128xf32>
    %16 = arith.maximumf %14, %15 : vector<8x128xf32>
    %c0_12 = arith.constant 0 : index
    %c0_13 = arith.constant 0 : index
    %17 = vector.load %arg6[%c0_12, %c0_13] : memref<128x10xf32, #tpu.memory_space<vmem>>, vector<128x10xf32>
    %cst_14 = arith.constant dense<0.000000e+00> : vector<8x10xf32>
    %18 = tpu.matmul %16, %17, %cst_14 {dimension_numbers = #tpu.dot_dimension_numbers<[1], [0], [0], [1], [0, 0, 1, 1], [], []>} : vector<8x128xf32>, vector<128x10xf32>, vector<8x10xf32> -> vector<8x10xf32>
    %c0_15 = arith.constant 0 : index
    %c0_16 = arith.constant 0 : index
    %19 = vector.load %arg7[%c0_15, %c0_16] : memref<1x10xf32, #tpu.memory_space<vmem>>, vector<1x10xf32>
    %20 = vector.broadcast %19 : vector<1x10xf32> to vector<8x10xf32>
    %21 = arith.addf %18, %20 : vector<8x10xf32>
    %c0_17 = arith.constant 0 : index
    %c0_18 = arith.constant 0 : index
    %22 = vector.load %arg8[%c0_17, %c0_18] : memref<8x10xf32, #tpu.memory_space<vmem>>, vector<8x10xf32>
    tpu.vector_store %arg8[%c0_17, %c0_18], %21 {strides = array<i32>} : memref<8x10xf32, #tpu.memory_space<vmem>>, vector<8x10xf32>,
    return
  }
  func.func @transform_0(%arg0: i32) -> (i32, i32) {
    %c0_i32 = arith.constant 0 : i32
    %c0_i32_0 = arith.constant 0 : i32
    return %arg0, %c0_i32 : i32, i32
  }
  func.func @transform_1(%arg0: i32) -> (i32, i32) {
    %c0_i32 = arith.constant 0 : i32
    %c0_i32_0 = arith.constant 0 : i32
    %c0_i32_1 = arith.constant 0 : i32
    return %c0_i32, %c0_i32_0 : i32, i32
  }
  func.func @transform_2(%arg0: i32) -> (i32, i32) {
    %c0_i32 = arith.constant 0 : i32
    %c0_i32_0 = arith.constant 0 : i32
    %c0_i32_1 = arith.constant 0 : i32
    return %c0_i32, %c0_i32_0 : i32, i32
  }
  func.func @transform_3(%arg0: i32) -> (i32, i32) {
    %c0_i32 = arith.constant 0 : i32
    %c0_i32_0 = arith.constant 0 : i32
    %c0_i32_1 = arith.constant 0 : i32
    return %c0_i32, %c0_i32_0 : i32, i32
  }
  func.func @transform_4(%arg0: i32) -> (i32, i32) {
    %c0_i32 = arith.constant 0 : i32
    %c0_i32_0 = arith.constant 0 : i32
    %c0_i32_1 = arith.constant 0 : i32
    return %c0_i32, %c0_i32_0 : i32, i32
  }
  func.func @transform_5(%arg0: i32) -> (i32, i32) {
    %c0_i32 = arith.constant 0 : i32
    %c0_i32_0 = arith.constant 0 : i32
    %c0_i32_1 = arith.constant 0 : i32
    return %c0_i32, %c0_i32_0 : i32, i32
  }
  func.func @transform_6(%arg0: i32) -> (i32, i32) {
    %c0_i32 = arith.constant 0 : i32
    %c0_i32_0 = arith.constant 0 : i32
    %c0_i32_1 = arith.constant 0 : i32
    return %c0_i32, %c0_i32_0 : i32, i32
  }
  func.func @transform_7(%arg0: i32) -> (i32, i32) {
    %c0_i32 = arith.constant 0 : i32
    %c0_i32_0 = arith.constant 0 : i32
    return %arg0, %c0_i32 : i32, i32
  }
}

</mosaic_0001>

<llo_original>
// kernel: mlp_forward.1
$region0: #{mlp_forward.1}
  #allocation0 [shape = 'u32[]', space=smem, size = 0x4, offset = 0x4, fixed_abs, tag = 'smem constant byte address 0x4 - core index']
  #allocation1 [shape = 'u32[144,128]{1,0:T(1,128)}', space=vmem, size = 0x12000, scoped, tag = 'internal scratch']
  %s0 = inlined_call_operand.vmem [shape: f32[8,32], index: 0, kind: input, shape index: {}]
  %s1 = inlined_call_operand.vmem [shape: bf16[32,256], index: 1, kind: input, shape index: {}]
  %s2 = inlined_call_operand.vmem [shape: f32[1,256], index: 2, kind: input, shape index: {}]
  %s3 = inlined_call_operand.vmem [shape: bf16[256,128], index: 3, kind: input, shape index: {}]
  %s4 = inlined_call_operand.vmem [shape: f32[1,128], index: 4, kind: input, shape index: {}]
  %s5 = inlined_call_operand.vmem [shape: f32[128,10], index: 5, kind: input, shape index: {}]
  %s6 = inlined_call_operand.vmem [shape: f32[1,10], index: 6, kind: input, shape index: {}]
  %s7 = inlined_call_operand.hbm [shape: f32[8,10], index: 7, kind: output, shape index: {}]
  %s8 = sld [smem:[#allocation0]]
  $region38: #{mlp_forward.1} parent=0
    _
  %s10 = ssub.s32 1, %s8
  %s11 = scalar_select 0, %s10, %s8
  $region1: #{mlp_forward.1} parent=0
    #allocation2 [shape = 'u8[4096]{0}', space=vmem, size = 0x1000, scoped, tag = 'output window, operand 0, single buffered']
    #allocation3 [shape = 's32[1]{0}', space=sflag, size = 0x4, scoped, tag = 'scoped memory for mlp_forward.1']
    %12 = vsyncpa [#allocation3], 0
    // Predicated region
    $region2: #{mlp_forward.1} parent=1 // pred_check
      _
    $region3: #{mlp_forward.1} parent=1 // pred_check_branch
      %14 = sbr.rel (0) target = $region5
    $region4: #{mlp_forward.1} parent=1 // pred_region
      _
    $region5: #{mlp_forward.1} parent=1 // pred_fallthru
      _
    // Predicated region
    $region6: #{mlp_forward.1} parent=1 // pred_check
      _
    $region7: #{mlp_forward.1} parent=1 // pred_check_branch
      %16 = sbr.rel (0) target = $region9
    $region8: #{mlp_forward.1} parent=1 // pred_region
      _
    $region9: #{mlp_forward.1} parent=1 // pred_fallthru
      _
    // Predicated region
    $region10: #{mlp_forward.1} parent=1 // pred_check
      _
    $region11: #{mlp_forward.1} parent=1 // pred_check_branch
      %18 = sbr.rel (0) target = $region13
    $region12: #{mlp_forward.1} parent=1 // pred_region
      _
    $region13: #{mlp_forward.1} parent=1 // pred_fallthru
      _
    // Predicated region
    $region14: #{mlp_forward.1} parent=1 // pred_check
      _
    $region15: #{mlp_forward.1} parent=1 // pred_check_branch
      %20 = sbr.rel (0) target = $region17
    $region16: #{mlp_forward.1} parent=1 // pred_region
      _
    $region17: #{mlp_forward.1} parent=1 // pred_fallthru
      _
    // Predicated region
    $region18: #{mlp_forward.1} parent=1 // pred_check
      _
    $region19: #{mlp_forward.1} parent=1 // pred_check_branch
      %22 = sbr.rel (0) target = $region21
    $region20: #{mlp_forward.1} parent=1 // pred_region
      _
    $region21: #{mlp_forward.1} parent=1 // pred_fallthru
      _
    // Predicated region
    $region22: #{mlp_forward.1} parent=1 // pred_check
      _
    $region23: #{mlp_forward.1} parent=1 // pred_check_branch
      %24 = sbr.rel (0) target = $region25
    $region24: #{mlp_forward.1} parent=1 // pred_region
      _
    $region25: #{mlp_forward.1} parent=1 // pred_fallthru
      _
    // Predicated region
    $region26: #{mlp_forward.1} parent=1 // pred_check
      _
    $region27: #{mlp_forward.1} parent=1 // pred_check_branch
      %26 = sbr.rel (0) target = $region29
    $region28: #{mlp_forward.1} parent=1 // pred_region
      _
    $region29: #{mlp_forward.1} parent=1 // pred_fallthru
      _
    %v28 = vld [vmem:[%s0] sm:$0xff]
    %v29 = vpack.c.bf16 %v28, %v28
    %v30 = vld [vmem:[%s1] sm:$0xff]
    %v31 = vld [vmem:[%s1 + $0x8] sm:$0xff]
    %v32 = vld [vmem:[%s1 + $0x10] sm:$0xff]
    %v33 = vld [vmem:[%s1 + $0x18] sm:$0xff]
    %v34 = vld [vmem:[%s2] sm:$0x3]
    %v36 = vlaneseq
    %v37 = vshrl.u32 %v36, 7
    %v38 = vsub.s32 0, %v37
    %v39 = vrot.slane %v34, %v38
    %v40 = vlaneseq
    %v41 = vshrl.u32 %v40, 7
    %v42 = vsub.s32 1, %v41
    %v43 = vrot.slane %v34, %v42
    %v50 = vunpack.c.l.b16 %v30
    %v51 = vunpack.c.h.b16 %v30
    %v52 = vunpack.c.l.b16 %v31
    %v53 = vunpack.c.h.b16 %v31
    %v54 = vunpack.c.l.b16 %v32
    %v55 = vunpack.c.h.b16 %v32
    %v56 = vunpack.c.l.b16 %v33
    %v57 = vunpack.c.h.b16 %v33
    %v58 = vpack.c.b16 %v52, %v50
    %v59 = vpack.c.b16 %v53, %v51
    %v60 = vpack.c.b16 %v56, %v54
    %v61 = vpack.c.b16 %v57, %v55
    %vm66 = vcmask 261120
    %v68 = vsel %vm66, %v29, 0
    %70 = vmatprep.subr.bf16.mxu0 %v59
    %71 = vmatpush1.bf16.msra.mxu0 %v58
    %72 = vmatprep.subr.bf16.mxu0 %v61
    %73 = vmatpush1.bf16.msra.mxu0 %v60
    %74 = vmatprep.subr.bf16.mxu0 0
    %75 = vmatpush1.bf16.msra.mxu0 0
    %76 = vmatprep.subr.bf16.mxu0 0
    %77 = vmatpush1.bf16.msra.mxu0 0
    %78 = vmatprep.subr.bf16.mxu0 0
    %79 = vmatpush1.bf16.msra.mxu0 0
    %80 = vmatprep.subr.bf16.mxu0 0
    %81 = vmatpush1.bf16.msra.mxu0 0
    %82 = vmatprep.subr.bf16.mxu0 0
    %83 = vmatpush1.bf16.msra.mxu0 0
    %84 = vmatprep.subr.bf16.mxu0 0
    %85 = vmatpush1.bf16.msra.mxu0 0
    %86 = vmatprep.subr.bf16.mxu0 0
    %87 = vmatpush1.bf16.msra.mxu0 0
    %88 = vmatprep.subr.bf16.mxu0 0
    %89 = vmatpush1.bf16.msra.mxu0 0
    %90 = vmatprep.subr.bf16.mxu0 0
    %91 = vmatpush1.bf16.msra.mxu0 0
    %92 = vmatprep.subr.bf16.mxu0 0
    %93 = vmatpush1.bf16.msra.mxu0 0
    %94 = vmatprep.subr.bf16.mxu0 0
    %95 = vmatpush1.bf16.msra.mxu0 0
    %96 = vmatprep.subr.bf16.mxu0 0
    %97 = vmatpush1.bf16.msra.mxu0 0
    %98 = vmatprep.subr.bf16.mxu0 0
    %99 = vmatpush1.bf16.msra.mxu0 0
    %100 = vmatprep.subr.bf16.mxu0 0
    %101 = vmatpush1.bf16.msra.mxu0 0
    %102 = vmatprep.mubr.bf16.mxu0 0
    %103 = vmatmul.mubr.bf16.gmra.mrb[0].mxu0 %v68
    %v104 = vpop.f32.mrb[0].mxu0
    %v105 = vadd.f32 %v39, %v104
    %v106 = vpop.f32.mrb[0].mxu0
    %v107 = vadd.f32 %v43, %v106
    %v108 = vpop.f32.mrb[0].mxu0
    %v109 = vpop.f32.mrb[0].mxu0
    %110 = vdwg.mxu0
    %v111 = vmax.f32 %v105, 0.0
    %v112 = vmax.f32 %v107, 0.0
    %v113 = vpack.c.bf16 %v111, %v111
    %v114 = vpack.c.bf16 %v112, %v112
    %v115 = vld [vmem:[%s3] sm:$0xf]
    %v116 = vld [vmem:[%s3 + $0x4] sm:$0xf]
    %v117 = vld [vmem:[%s3 + $0x8] sm:$0xf]
    %v118 = vld [vmem:[%s3 + $0xc] sm:$0xf]
    %v119 = vld [vmem:[%s3 + $0x10] sm:$0xf]
    %v120 = vld [vmem:[%s3 + $0x14] sm:$0xf]
    %v121 = vld [vmem:[%s3 + $0x18] sm:$0xf]
    %v122 = vld [vmem:[%s3 + $0x1c] sm:$0xf]
    %v123 = vld [vmem:[%s3 + $0x20] sm:$0xf]
    %v124 = vld [vmem:[%s3 + $0x24] sm:$0xf]
    %v125 = vld [vmem:[%s3 + $0x28] sm:$0xf]
    %v126 = vld [vmem:[%s3 + $0x2c] sm:$0xf]
    %v127 = vld [vmem:[%s3 + $0x30] sm:$0xf]
    %v128 = vld [vmem:[%s3 + $0x34] sm:$0xf]
    %v129 = vld [vmem:[%s3 + $0x38] sm:$0xf]
    %v130 = vld [vmem:[%s3 + $0x3c] sm:$0xf]
    %v131 = vld [vmem:[%s3 + $0x40] sm:$0xf]
    %v132 = vld [vmem:[%s3 + $0x44] sm:$0xf]
    %v133 = vld [vmem:[%s3 + $0x48] sm:$0xf]
    %v134 = vld [vmem:[%s3 + $0x4c] sm:$0xf]
    %v135 = vld [vmem:[%s3 + $0x50] sm:$0xf]
    %v136 = vld [vmem:[%s3 + $0x54] sm:$0xf]
    %v137 = vld [vmem:[%s3 + $0x58] sm:$0xf]
    %v138 = vld [vmem:[%s3 + $0x5c] sm:$0xf]
    %v139 = vld [vmem:[%s3 + $0x60] sm:$0xf]
    %v140 = vld [vmem:[%s3 + $0x64] sm:$0xf]
    %v141 = vld [vmem:[%s3 + $0x68] sm:$0xf]
    %v142 = vld [vmem:[%s3 + $0x6c] sm:$0xf]
    %v143 = vld [vmem:[%s3 + $0x70] sm:$0xf]
    %v144 = vld [vmem:[%s3 + $0x74] sm:$0xf]
    %v145 = vld [vmem:[%s3 + $0x78] sm:$0xf]
    %v146 = vld [vmem:[%s3 + $0x7c] sm:$0xf]
    %v147 = vld [vmem:[%s4] sm:$0x1]
    %v149 = vlaneseq
    %v150 = vshrl.u32 %v149, 7
    %v151 = vsub.s32 0, %v150
    %v152 = vrot.slane %v147, %v151
    %v186 = vunpack.c.l.b16 %v115
    %v187 = vunpack.c.l.b16 %v116
    %v188 = vunpack.c.l.b16 %v117
    %v189 = vunpack.c.l.b16 %v118
    %v190 = vunpack.c.l.b16 %v119
    %v191 = vunpack.c.l.b16 %v120
    %v192 = vunpack.c.l.b16 %v121
    %v193 = vunpack.c.l.b16 %v122
    %v194 = vunpack.c.l.b16 %v123
    %v195 = vunpack.c.l.b16 %v124
    %v196 = vunpack.c.l.b16 %v125
    %v197 = vunpack.c.l.b16 %v126
    %v198 = vunpack.c.l.b16 %v127
    %v199 = vunpack.c.l.b16 %v128
    %v200 = vunpack.c.l.b16 %v129
    %v201 = vunpack.c.l.b16 %v130
    %v202 = vunpack.c.l.b16 %v131
    %v203 = vunpack.c.l.b16 %v132
    %v204 = vunpack.c.l.b16 %v133
    %v205 = vunpack.c.l.b16 %v134
    %v206 = vunpack.c.l.b16 %v135
    %v207 = vunpack.c.l.b16 %v136
    %v208 = vunpack.c.l.b16 %v137
    %v209 = vunpack.c.l.b16 %v138
    %v210 = vunpack.c.l.b16 %v139
    %v211 = vunpack.c.l.b16 %v140
    %v212 = vunpack.c.l.b16 %v141
    %v213 = vunpack.c.l.b16 %v142
    %v214 = vunpack.c.l.b16 %v143
    %v215 = vunpack.c.l.b16 %v144
    %v216 = vunpack.c.l.b16 %v145
    %v217 = vunpack.c.l.b16 %v146
    %v218 = vpack.c.b16 %v187, %v186
    %v219 = vpack.c.b16 %v189, %v188
    %v220 = vpack.c.b16 %v191, %v190
    %v221 = vpack.c.b16 %v193, %v192
    %v222 = vpack.c.b16 %v195, %v194
    %v223 = vpack.c.b16 %v197, %v196
    %v224 = vpack.c.b16 %v199, %v198
    %v225 = vpack.c.b16 %v201, %v200
    %v226 = vpack.c.b16 %v203, %v202
    %v227 = vpack.c.b16 %v205, %v204
    %v228 = vpack.c.b16 %v207, %v206
    %v229 = vpack.c.b16 %v209, %v208
    %v230 = vpack.c.b16 %v211, %v210
    %v231 = vpack.c.b16 %v213, %v212
    %v232 = vpack.c.b16 %v215, %v214
    %v233 = vpack.c.b16 %v217, %v216
    %250 = vmatprep.subr.bf16.mxu0 0
    %251 = vmatpush1.bf16.msra.mxu0 %v218
    %252 = vmatprep.subr.bf16.mxu0 0
    %253 = vmatpush1.bf16.msra.mxu0 %v219
    %254 = vmatprep.subr.bf16.mxu0 0
    %255 = vmatpush1.bf16.msra.mxu0 %v220
    %256 = vmatprep.subr.bf16.mxu0 0
    %257 = vmatpush1.bf16.msra.mxu0 %v221
    %258 = vmatprep.subr.bf16.mxu0 0
    %259 = vmatpush1.bf16.msra.mxu0 %v222
    %260 = vmatprep.subr.bf16.mxu0 0
    %261 = vmatpush1.bf16.msra.mxu0 %v223
    %262 = vmatprep.subr.bf16.mxu0 0
    %263 = vmatpush1.bf16.msra.mxu0 %v224
    %264 = vmatprep.subr.bf16.mxu0 0
    %265 = vmatpush1.bf16.msra.mxu0 %v225
    %266 = vmatprep.subr.bf16.mxu0 0
    %267 = vmatpush1.bf16.msra.mxu0 %v226
    %268 = vmatprep.subr.bf16.mxu0 0
    %269 = vmatpush1.bf16.msra.mxu0 %v227
    %270 = vmatprep.subr.bf16.mxu0 0
    %271 = vmatpush1.bf16.msra.mxu0 %v228
    %272 = vmatprep.subr.bf16.mxu0 0
    %273 = vmatpush1.bf16.msra.mxu0 %v229
    %274 = vmatprep.subr.bf16.mxu0 0
    %275 = vmatpush1.bf16.msra.mxu0 %v230
    %276 = vmatprep.subr.bf16.mxu0 0
    %277 = vmatpush1.bf16.msra.mxu0 %v231
    %278 = vmatprep.subr.bf16.mxu0 0
    %279 = vmatpush1.bf16.msra.mxu0 %v232
    %280 = vmatprep.subr.bf16.mxu0 0
    %281 = vmatpush1.bf16.msra.mxu0 %v233
    %282 = vmatprep.mubr.bf16.mxu0 %v114
    %283 = vmatmul.mubr.bf16.gmra.mrb[0].mxu0 %v113
    %v284 = vpop.f32.mrb[0].mxu0
    %v285 = vadd.f32 %v152, %v284
    %v286 = vpop.f32.mrb[0].mxu0
    %v287 = vpop.f32.mrb[0].mxu0
    %v288 = vpop.f32.mrb[0].mxu0
    %289 = vdwg.mxu0
    %v290 = vmax.f32 %v285, 0.0
    %v291 = vld [vmem:[%s5] sm:$0xff]
    %v292 = vld [vmem:[%s5 + $0x8] sm:$0xff]
    %v293 = vld [vmem:[%s5 + $0x10] sm:$0xff]
    %v294 = vld [vmem:[%s5 + $0x18] sm:$0xff]
    %v295 = vld [vmem:[%s5 + $0x20] sm:$0xff]
    %v296 = vld [vmem:[%s5 + $0x28] sm:$0xff]
    %v297 = vld [vmem:[%s5 + $0x30] sm:$0xff]
    %v298 = vld [vmem:[%s5 + $0x38] sm:$0xff]
    %v299 = vld [vmem:[%s5 + $0x40] sm:$0xff]
    %v300 = vld [vmem:[%s5 + $0x48] sm:$0xff]
    %v301 = vld [vmem:[%s5 + $0x50] sm:$0xff]
    %v302 = vld [vmem:[%s5 + $0x58] sm:$0xff]
    %v303 = vld [vmem:[%s5 + $0x60] sm:$0xff]
    %v304 = vld [vmem:[%s5 + $0x68] sm:$0xff]
    %v305 = vld [vmem:[%s5 + $0x70] sm:$0xff]
    %v306 = vld [vmem:[%s5 + $0x78] sm:$0xff]
    %v307 = vld [vmem:[%s6] sm:$0x1]
    %v309 = vlaneseq
    %v310 = vshrl.u32 %v309, 7
    %v311 = vsub.s32 0, %v310
    %v312 = vrot.slane %v307, %v311
    %314 = vmatprep.subr.mxu0 0.0
    %315 = vmatpush1.msra.mxu0 %v291
    %316 = vmatprep.subr.mxu0 0.0
    %317 = vmatpush1.msra.mxu0 %v292
    %318 = vmatprep.subr.mxu0 0.0
    %319 = vmatpush1.msra.mxu0 %v293
    %320 = vmatprep.subr.mxu0 0.0
    %321 = vmatpush1.msra.mxu0 %v294
    %322 = vmatprep.subr.mxu0 0.0
    %323 = vmatpush1.msra.mxu0 %v295
    %324 = vmatprep.subr.mxu0 0.0
    %325 = vmatpush1.msra.mxu0 %v296
    %326 = vmatprep.subr.mxu0 0.0
    %327 = vmatpush1.msra.mxu0 %v297
    %328 = vmatprep.subr.mxu0 0.0
    %329 = vmatpush1.msra.mxu0 %v298
    %330 = vmatprep.subr.mxu0 0.0
    %331 = vmatpush1.msra.mxu0 %v299
    %332 = vmatprep.subr.mxu0 0.0
    %333 = vmatpush1.msra.mxu0 %v300
    %334 = vmatprep.subr.mxu0 0.0
    %335 = vmatpush1.msra.mxu0 %v301
    %336 = vmatprep.subr.mxu0 0.0
    %337 = vmatpush1.msra.mxu0 %v302
    %338 = vmatprep.subr.mxu0 0.0
    %339 = vmatpush1.msra.mxu0 %v303
    %340 = vmatprep.subr.mxu0 0.0
    %341 = vmatpush1.msra.mxu0 %v304
    %342 = vmatprep.subr.mxu0 0.0
    %343 = vmatpush1.msra.mxu0 %v305
    %344 = vmatprep.subr.mxu0 0.0
    %345 = vmatpush1.msra.mxu0 %v306
    %346 = vmatprep.subr.mxu0 0.0
    %347 = vmatpush1.msra.mxu0 0.0
    %348 = vmatprep.subr.mxu0 0.0
    %349 = vmatpush1.msra.mxu0 0.0
    %350 = vmatprep.subr.mxu0 0.0
    %351 = vmatpush1.msra.mxu0 0.0
    %352 = vmatprep.subr.mxu0 0.0
    %353 = vmatpush1.msra.mxu0 0.0
    %354 = vmatprep.subr.mxu0 0.0
    %355 = vmatpush1.msra.mxu0 0.0
    %356 = vmatprep.subr.mxu0 0.0
    %357 = vmatpush1.msra.mxu0 0.0
    %358 = vmatprep.subr.mxu0 0.0
    %359 = vmatpush1.msra.mxu0 0.0
    %360 = vmatprep.subr.mxu0 0.0
    %361 = vmatpush1.msra.mxu0 0.0
    %362 = vmatprep.subr.mxu0 0.0
    %363 = vmatpush1.msra.mxu0 0.0
    %364 = vmatprep.subr.mxu0 0.0
    %365 = vmatpush1.msra.mxu0 0.0
    %366 = vmatprep.subr.mxu0 0.0
    %367 = vmatpush1.msra.mxu0 0.0
    %368 = vmatprep.subr.mxu0 0.0
    %369 = vmatpush1.msra.mxu0 0.0
    %370 = vmatprep.subr.mxu0 0.0
    %371 = vmatpush1.msra.mxu0 0.0
    %372 = vmatprep.subr.mxu0 0.0
    %373 = vmatpush1.msra.mxu0 0.0
    %374 = vmatprep.subr.mxu0 0.0
    %375 = vmatpush1.msra.mxu0 0.0
    %376 = vmatprep.subr.mxu0 0.0
    %377 = vmatpush1.msra.mxu0 0.0
    %378 = vmatprep.mubr.f32.mxu0 0.0
    %379 = vmatmul.mubr.f32.gmra.mrb[0].mxu0 %v290
    %v380 = vpop.f32.mrb[0].mxu0
    %v381 = vadd.f32 %v312, %v380
    %v382 = vpop.f32.mrb[0].mxu0
    %383 = vdwg.mxu0
    %vm384 = vcmask 80896
    %385 = vst.msk [vmem:[#allocation2] sm:$0xff] %vm384, %v381
    // Predicated region
    $region30: #{mlp_forward.1} parent=1 // pred_check
      _
    $region31: #{mlp_forward.1} parent=1 // pred_check_branch
      %387 = sbr.rel (0) target = $region33
    $region32: #{mlp_forward.1} parent=1 // pred_region
      %s389 = ssub.s32 128, 128
      %390 = vsyncadd [#allocation3], %s389
      %s392 = sshll.u32 [#allocation2], 4
      %s393 = int_to_ptr.vmem [resolvable:$true] %s392
      %395 = dma.vmem_to_hbm [thread:$0]  %s393, 128, %s7, [#allocation3]
    $region33: #{mlp_forward.1} parent=1 // pred_fallthru
      _
    // Predicated region
    $region34: #{mlp_forward.1} parent=1 // pred_check
      _
    $region35: #{mlp_forward.1} parent=1 // pred_check_branch
      %397 = sbr.rel (0) target = $region37
    $region36: #{mlp_forward.1} parent=1 // pred_region
      %398 = dma.done [#allocation3], 128
    $region37: #{mlp_forward.1} parent=1 // pred_fallthru
      _
    %399 = vsyncpa [#allocation3], 1

</llo_original>
